<compile_context>
chip_gen: v6e
topology: v6e:2x2x1
jax: 0.10.0
libtpu: 0.0.40
codegen_flags: <defaults>
</compile_context>

<pallas_src>
import jax
import jax.numpy as jnp
from jax.experimental import pallas as pl
from jax.experimental.pallas import tpu as pltpu

EPS = 1e-06

# Default tile budget: 3 inputs x 2 pipeline buffers x (256 x 2048) f32
# = 12 MiB of VMEM -> fits comfortably under v7x's 64 MiB and the 16/32 MiB
# scoped defaults once vmem_limit_bytes is set explicitly.
_DEF_TILE_R = 256
_DEF_TILE_HW = 2048


def _row_partials_kernel(pred_ref, label_ref, mask_ref, sum_d_ref, sum_m_ref):
    """One (TILE_R, TILE_HW) block: accumulate per-row sums into resident outs."""
    @pl.when(pl.program_id(1) == 0)
    def _init():
        sum_d_ref[...] = jnp.zeros_like(sum_d_ref)
        sum_m_ref[...] = jnp.zeros_like(sum_m_ref)

    p = pred_ref[...].astype(jnp.float32)
    l = label_ref[...].astype(jnp.float32)
    m = mask_ref[...].astype(jnp.float32)

    # distance * mask summand = |p - l| * m * m  (mask is not assumed binary,
    # keeps exact parity with the PyTorch forward).
    d = jnp.abs(p - l) * m * m

    sum_d_ref[...] += jnp.sum(d, axis=-1, keepdims=True)
    sum_m_ref[...] += jnp.sum(m, axis=-1, keepdims=True)


def _round_up(x, m):
    return (x + m - 1) // m * m


def distance_loss(pred, label, use_mask, *, tile_r=_DEF_TILE_R, tile_hw=_DEF_TILE_HW):
    """Pallas implementation of DistanceLoss.forward. Returns a scalar (f32)."""
    assert pred.shape == label.shape == use_mask.shape
    shape = pred.shape
    assert len(shape) >= 3, "expects (..., C, H, W)"

    C = shape[-3]
    HW = shape[-2] * shape[-1]
    B = 1
    for s in shape[:-3]:
        B *= s
    R = B * C

    # Stream native dtypes; only booleans need a numeric container for the DMA.
    if use_mask.dtype == jnp.bool_:
        use_mask = use_mask.astype(jnp.float32)

    # Tile sizes: lane axis multiple of 128, row axis multiple of 8.
    t_r = min(_round_up(R, 8), _round_up(tile_r, 8))
    t_hw = min(_round_up(HW, 128), _round_up(tile_hw, 128))
    R_pad = _round_up(R, t_r)
    HW_pad = _round_up(HW, t_hw)

    def _prep(x):
        x2 = x.reshape(R, HW)
        if (R_pad, HW_pad) != (R, HW):
            # Zero padding is neutral: mask==0 in padding => contributes 0
            # to both sum_d and sum_m.
            x2 = jnp.pad(x2, ((0, R_pad - R), (0, HW_pad - HW)))
        return x2

    pred2 = _prep(pred)
    label2 = _prep(label)
    mask2 = _prep(use_mask)

    grid = (R_pad // t_r, HW_pad // t_hw)

    in_specs = [
        pl.BlockSpec((t_r, t_hw), lambda i, k: (i, k)),
        pl.BlockSpec((t_r, t_hw), lambda i, k: (i, k)),
        pl.BlockSpec((t_r, t_hw), lambda i, k: (i, k)),
    ]
    out_specs = (
        pl.BlockSpec((t_r, 1), lambda i, k: (i, 0)),
        pl.BlockSpec((t_r, 1), lambda i, k: (i, 0)),
    )
    out_shape = (
        jax.ShapeDtypeStruct((R_pad, 1), jnp.float32),
        jax.ShapeDtypeStruct((R_pad, 1), jnp.float32),
    )

    # VMEM budget: 2 pipeline buffers per input tile + resident outputs + margin.
    in_tile_bytes = sum(
        2 * t_r * t_hw * jnp.dtype(x.dtype).itemsize for x in (pred2, label2, mask2)
    )
    out_bytes = 2 * 2 * t_r * 4
    vmem_limit = int(min(max(in_tile_bytes + out_bytes + (8 << 20), 32 << 20), 64 << 20))

    bytes_accessed = (
        sum(int(x.size) * jnp.dtype(x.dtype).itemsize for x in (pred2, label2, mask2))
        + 2 * R_pad * 4
    )
    cost = pl.CostEstimate(
        flops=5 * R_pad * HW_pad, transcendentals=0, bytes_accessed=bytes_accessed
    )

    sum_d_pad, sum_m_pad = pl.pallas_call(
        _row_partials_kernel,
        out_shape=out_shape,
        grid=grid,
        in_specs=in_specs,
        out_specs=out_specs,
        compiler_params=pltpu.CompilerParams(
            dimension_semantics=("parallel", "arbitrary"),
            vmem_limit_bytes=vmem_limit,
        ),
        cost_estimate=cost,
    )(pred2, label2, mask2)

    # Tiny epilogue in plain JAX (O(B*C) flops).
    sum_d = sum_d_pad[:R, 0].reshape(B, C)
    sum_m = sum_m_pad[:R, 0].reshape(B, C)

    sum_samples_loss = jnp.mean(sum_d, axis=-1, keepdims=True)   # mean over C
    ratio = sum_samples_loss / (sum_m + EPS)                     # broadcast over C
    valid_flag = (sum_m > 0.0).astype(jnp.float32)
    # NOTE: if every mask is all-zero, sum(valid_flag)==0 and this returns
    # NaN/Inf, matching the PyTorch reference.
    return jnp.sum(ratio) / jnp.sum(valid_flag)


def distance_loss_ref(pred, label, use_mask):
    """Pure-JAX reference matching the PyTorch forward exactly."""
    distance = jnp.abs(pred - label) * use_mask
    num_samples = jnp.sum(
        jnp.sum(use_mask, axis=-1, keepdims=True), axis=-2, keepdims=True)
    sum_samples_loss = jnp.mean(
        jnp.sum(jnp.sum(distance * use_mask, axis=-1, keepdims=True),
                axis=-2, keepdims=True),
        axis=-3, keepdims=True)
    valid_flag = (num_samples > 0).astype(jnp.float32)
    return jnp.sum(sum_samples_loss / (num_samples + EPS)) / jnp.sum(valid_flag)


if __name__ == "__main__":
    key = jax.random.PRNGKey(0)
    k1, k2, k3 = jax.random.split(key, 3)

    B, C, H, W = 2, 4, 16, 16
    pred = jax.random.normal(k1, (B, C, H, W), dtype=jnp.float32)
    label = jax.random.normal(k2, (B, C, H, W), dtype=jnp.float32)
    use_mask = (jax.random.uniform(k3, (B, C, H, W)) > 0.5).astype(jnp.float32)

    out = distance_loss(pred, label, use_mask)
    out = jax.block_until_ready(out)

    ref = distance_loss_ref(pred, label, use_mask)
    assert jnp.allclose(out, ref, rtol=1e-5, atol=1e-5), (out, ref)

    print("KERNEL_OK")
</pallas_src>

<mosaic_0001>
module attributes {stable_mosaic.version = 11 : i64} {
  func.func @_row_partials_kernel(%arg0: i32, %arg1: i32, %arg2: memref<8x256xf32, #tpu.memory_space<vmem>>, %arg3: memref<8x256xf32, #tpu.memory_space<vmem>>, %arg4: memref<8x256xf32, #tpu.memory_space<vmem>>, %arg5: memref<8x1xf32, #tpu.memory_space<vmem>>, %arg6: memref<8x1xf32, #tpu.memory_space<vmem>>) attributes {dimension_semantics = [#tpu.dimension_semantics<parallel>, #tpu.dimension_semantics<arbitrary>], iteration_bounds = array<i64: 1, 1>, scalar_prefetch = 0 : i64, scratch_operands = 0 : i64, tpu.core_type = #tpu.core_type<tc>, window_params = [{transform_indices = @transform_0, window_bounds = array<i64: 8, 256>}, {transform_indices = @transform_1, window_bounds = array<i64: 8, 256>}, {transform_indices = @transform_2, window_bounds = array<i64: 8, 256>}, {transform_indices = @transform_3, window_bounds = array<i64: 8, 1>}, {transform_indices = @transform_4, window_bounds = array<i64: 8, 1>}]} {
    %c0_i32 = arith.constant 0 : i32
    %0 = arith.cmpi eq, %arg1, %c0_i32 : i32
    %1 = arith.extui %0 : i1 to i32
    %c0_i32_0 = arith.constant 0 : i32
    %2 = arith.cmpi ne, %1, %c0_i32_0 : i32
    scf.if %2 {
      %cst_15 = arith.constant 0.000000e+00 : f32
      %20 = vector.broadcast %cst_15 : f32 to vector<8x1xf32>
      %c0_16 = arith.constant 0 : index
      %c0_17 = arith.constant 0 : index
      %21 = vector.load %arg5[%c0_16, %c0_17] : memref<8x1xf32, #tpu.memory_space<vmem>>, vector<8x1xf32>
      tpu.vector_store %arg5[%c0_16, %c0_17], %20 {strides = array<i32>} : memref<8x1xf32, #tpu.memory_space<vmem>>, vector<8x1xf32>,
      %cst_18 = arith.constant 0.000000e+00 : f32
      %22 = vector.broadcast %cst_18 : f32 to vector<8x1xf32>
      %c0_19 = arith.constant 0 : index
      %c0_20 = arith.constant 0 : index
      %23 = vector.load %arg6[%c0_19, %c0_20] : memref<8x1xf32, #tpu.memory_space<vmem>>, vector<8x1xf32>
      tpu.vector_store %arg6[%c0_19, %c0_20], %22 {strides = array<i32>} : memref<8x1xf32, #tpu.memory_space<vmem>>, vector<8x1xf32>,
    } else {
    }
    %c0 = arith.constant 0 : index
    %c0_1 = arith.constant 0 : index
    %3 = vector.load %arg2[%c0, %c0_1] : memref<8x256xf32, #tpu.memory_space<vmem>>, vector<8x256xf32>
    %c0_2 = arith.constant 0 : index
    %c0_3 = arith.constant 0 : index
    %4 = vector.load %arg3[%c0_2, %c0_3] : memref<8x256xf32, #tpu.memory_space<vmem>>, vector<8x256xf32>
    %c0_4 = arith.constant 0 : index
    %c0_5 = arith.constant 0 : index
    %5 = vector.load %arg4[%c0_4, %c0_5] : memref<8x256xf32, #tpu.memory_space<vmem>>, vector<8x256xf32>
    %6 = arith.subf %3, %4 : vector<8x256xf32>
    %7 = math.absf %6 : vector<8x256xf32>
    %8 = arith.mulf %7, %5 : vector<8x256xf32>
    %9 = arith.mulf %8, %5 : vector<8x256xf32>
    %c0_6 = arith.constant 0 : index
    %c0_7 = arith.constant 0 : index
    %10 = vector.load %arg5[%c0_6, %c0_7] : memref<8x1xf32, #tpu.memory_space<vmem>>, vector<8x1xf32>
    %cst = arith.constant dense<0.000000e+00> : vector<8xf32>
    %11 = vector.multi_reduction <add>, %9, %cst [1] : vector<8x256xf32> to vector<8xf32>
    %12 = vector.shape_cast %11 : vector<8xf32> to vector<8x1xf32>
    %13 = arith.addf %10, %12 : vector<8x1xf32>
    %c0_8 = arith.constant 0 : index
    %c0_9 = arith.constant 0 : index
    %14 = vector.load %arg5[%c0_8, %c0_9] : memref<8x1xf32, #tpu.memory_space<vmem>>, vector<8x1xf32>
    tpu.vector_store %arg5[%c0_8, %c0_9], %13 {strides = array<i32>} : memref<8x1xf32, #tpu.memory_space<vmem>>, vector<8x1xf32>,
    %c0_10 = arith.constant 0 : index
    %c0_11 = arith.constant 0 : index
    %15 = vector.load %arg6[%c0_10, %c0_11] : memref<8x1xf32, #tpu.memory_space<vmem>>, vector<8x1xf32>
    %cst_12 = arith.constant dense<0.000000e+00> : vector<8xf32>
    %16 = vector.multi_reduction <add>, %5, %cst_12 [1] : vector<8x256xf32> to vector<8xf32>
    %17 = vector.shape_cast %16 : vector<8xf32> to vector<8x1xf32>
    %18 = arith.addf %15, %17 : vector<8x1xf32>
    %c0_13 = arith.constant 0 : index
    %c0_14 = arith.constant 0 : index
    %19 = vector.load %arg6[%c0_13, %c0_14] : memref<8x1xf32, #tpu.memory_space<vmem>>, vector<8x1xf32>
    tpu.vector_store %arg6[%c0_13, %c0_14], %18 {strides = array<i32>} : memref<8x1xf32, #tpu.memory_space<vmem>>, vector<8x1xf32>,
    return
  }
  func.func @transform_0(%arg0: i32, %arg1: i32) -> (i32, i32) {
    %c0_i32 = arith.constant 0 : i32
    return %arg0, %arg1 : i32, i32
  }
  func.func @transform_1(%arg0: i32, %arg1: i32) -> (i32, i32) {
    %c0_i32 = arith.constant 0 : i32
    return %arg0, %arg1 : i32, i32
  }
  func.func @transform_2(%arg0: i32, %arg1: i32) -> (i32, i32) {
    %c0_i32 = arith.constant 0 : i32
    return %arg0, %arg1 : i32, i32
  }
  func.func @transform_3(%arg0: i32, %arg1: i32) -> (i32, i32) {
    %c0_i32 = arith.constant 0 : i32
    %c0_i32_0 = arith.constant 0 : i32
    return %arg0, %c0_i32 : i32, i32
  }
  func.func @transform_4(%arg0: i32, %arg1: i32) -> (i32, i32) {
    %c0_i32 = arith.constant 0 : i32
    %c0_i32_0 = arith.constant 0 : i32
    return %arg0, %c0_i32 : i32, i32
  }
}

</mosaic_0001>

<llo_original>
// kernel: tpu_custom_call.1
$region0: #{tpu_custom_call.1}
  #allocation0 [shape = 'u32[]', space=smem, size = 0x4, offset = 0x4, fixed_abs, tag = 'smem constant byte address 0x4 - core index']
  #allocation1 [shape = 'u32[144,128]{1,0:T(1,128)}', space=vmem, size = 0x12000, scoped, tag = 'internal scratch']
  %s0 = inlined_call_operand.hbm [shape: f32[8,256], index: 0, kind: input, shape index: {}]
  %s1 = inlined_call_operand.hbm [shape: f32[8,256], index: 1, kind: input, shape index: {}]
  %s2 = inlined_call_operand.hbm [shape: f32[8,256], index: 2, kind: input, shape index: {}]
  %s3 = inlined_call_operand.vmem [shape: f32[8,1], index: 3, kind: output, shape index: {0}]
  %s4 = inlined_call_operand.vmem [shape: f32[8,1], index: 4, kind: output, shape index: {1}]
  %5 = xla_tuple %s3, %s4
  %s6 = sld [smem:[#allocation0]]
  $region46: #{tpu_custom_call.1} parent=0
    _
  %s8 = ssub.s32 1, %s6
  %s9 = scalar_select 0, %s8, %s6
  $region1: #{tpu_custom_call.1} parent=0
    #allocation2 [shape = 'u8[8192]{0}', space=vmem, size = 0x2000, scoped, tag = 'input window, operand 0, single buffered']
    #allocation3 [shape = 's32[1]{0}', space=sflag, size = 0x4, scoped, tag = 'scoped memory for tpu_custom_call.1']
    #allocation4 [shape = 'u8[8192]{0}', space=vmem, size = 0x2000, scoped, tag = 'input window, operand 1, single buffered']
    #allocation5 [shape = 's32[1]{0}', space=sflag, size = 0x4, scoped, tag = 'scoped memory for tpu_custom_call.1']
    #allocation6 [shape = 'u8[8192]{0}', space=vmem, size = 0x2000, scoped, tag = 'input window, operand 2, single buffered']
    %10 = vsyncpa [#allocation3], 0
    %11 = vsyncpa [#allocation5], 0
    // Predicated region
    $region2: #{tpu_custom_call.1} parent=1 // pred_check
      _
    $region3: #{tpu_custom_call.1} parent=1 // pred_check_branch
      %13 = sbr.rel (0) target = $region5
    $region4: #{tpu_custom_call.1} parent=1 // pred_region
      %s15 = ssub.s32 256, 256
      %16 = vsyncadd [#allocation3], %s15
      %s18 = sshll.u32 [#allocation2], 4
      %s19 = int_to_ptr.vmem [resolvable:$true] %s18
      %21 = dma.hbm_to_vmem [thread:$0]  %s0, 256, %s19, [#allocation3]
    $region5: #{tpu_custom_call.1} parent=1 // pred_fallthru
      _
    // Predicated region
    $region6: #{tpu_custom_call.1} parent=1 // pred_check
      _
    $region7: #{tpu_custom_call.1} parent=1 // pred_check_branch
      %23 = sbr.rel (0) target = $region9
    $region8: #{tpu_custom_call.1} parent=1 // pred_region
      %s25 = ssub.s32 256, 256
      %26 = vsyncadd [#allocation5], %s25
      %s28 = sshll.u32 [#allocation4], 4
      %s29 = int_to_ptr.vmem [resolvable:$true] %s28
      %31 = dma.hbm_to_vmem [thread:$0]  %s1, 256, %s29, [#allocation5]
    $region9: #{tpu_custom_call.1} parent=1 // pred_fallthru
      _
    // Predicated region
    $region10: #{tpu_custom_call.1} parent=1 // pred_check
      _
    $region11: #{tpu_custom_call.1} parent=1 // pred_check_branch
      %33 = sbr.rel (0) target = $region13
    $region12: #{tpu_custom_call.1} parent=1 // pred_region
      %s35 = ssub.s32 256, 256
      %36 = vsyncadd [#allocation5], %s35
      %s38 = sshll.u32 [#allocation6], 4
      %s39 = int_to_ptr.vmem [resolvable:$true] %s38
      %41 = dma.hbm_to_vmem [thread:$0]  %s2, 256, %s39, [#allocation5]
    $region13: #{tpu_custom_call.1} parent=1 // pred_fallthru
      _
    // Predicated region
    $region14: #{tpu_custom_call.1} parent=1 // pred_check
      _
    $region15: #{tpu_custom_call.1} parent=1 // pred_check_branch
      %43 = sbr.rel (0) target = $region17
    $region16: #{tpu_custom_call.1} parent=1 // pred_region
      %44 = dma.done [#allocation3], 256
    $region17: #{tpu_custom_call.1} parent=1 // pred_fallthru
      _
    // Predicated region
    $region18: #{tpu_custom_call.1} parent=1 // pred_check
      _
    $region19: #{tpu_custom_call.1} parent=1 // pred_check_branch
      %46 = sbr.rel (0) target = $region21
    $region20: #{tpu_custom_call.1} parent=1 // pred_region
      %47 = dma.done [#allocation5], 256
    $region21: #{tpu_custom_call.1} parent=1 // pred_fallthru
      _
    // Predicated region
    $region22: #{tpu_custom_call.1} parent=1 // pred_check
      _
    $region23: #{tpu_custom_call.1} parent=1 // pred_check_branch
      %49 = sbr.rel (0) target = $region25
    $region24: #{tpu_custom_call.1} parent=1 // pred_region
      %50 = dma.done [#allocation5], 256
    $region25: #{tpu_custom_call.1} parent=1 // pred_fallthru
      _
    %p51 = scmp.eq.s32.totalorder 0, 0
    // Predicated region
    $region26: #{tpu_custom_call.1} parent=1 // pred_check
      %p52 = pneg %p51
    $region27: #{tpu_custom_call.1} parent=1 // pred_check_branch
      %54 = sbr.rel (%p52) target = $region29
    $region28: #{tpu_custom_call.1} parent=1 // pred_region
      %vm55 = vcmask 7168
      %56 = vst.msk [vmem:[%s3] sm:$0xff] %vm55, 0.0
      %57 = vst.msk [vmem:[%s4] sm:$0xff] %vm55, 0.0
    $region29: #{tpu_custom_call.1} parent=1 // pred_fallthru
      _
    %v58 = vld [vmem:[#allocation2] sm:$0xff]
    %v59 = vld [vmem:[#allocation2 + $0x8] sm:$0xff]
    %v60 = vld [vmem:[#allocation4] sm:$0xff]
    %v61 = vld [vmem:[#allocation4 + $0x8] sm:$0xff]
    %v62 = vld [vmem:[#allocation6] sm:$0xff]
    %v63 = vld [vmem:[#allocation6 + $0x8] sm:$0xff]
    %v64 = vsub.f32 %v58, %v60
    %v65 = vsub.f32 %v59, %v61
    %v66 = vand.u32 2147483647, %v64
    %v67 = vand.u32 2147483647, %v65
    %v68 = vmul.f32 %v66, %v62
    %v69 = vmul.f32 %v67, %v63
    %v70 = vmul.f32 %v68, %v62
    %v71 = vmul.f32 %v69, %v63
    %v72 = vld [vmem:[%s3] sm:$0xff]
    %v73 = vadd.f32 %v70, %v71
    %74 = vadd.xlane.f32.xlu0 %v73
    %v75 = vpop.xlane.xlu0 %74
    %v76 = vadd.f32 %v72, %v75
    %vm77 = vcmask 7168
    %78 = vst.msk [vmem:[%s3] sm:$0xff] %vm77, %v76
    %v79 = vld [vmem:[%s4] sm:$0xff]
    %v80 = vadd.f32 %v62, %v63
    %81 = vadd.xlane.f32.xlu0 %v80
    %v82 = vpop.xlane.xlu0 %81
    %v83 = vadd.f32 %v79, %v82
    %84 = vst.msk [vmem:[%s4] sm:$0xff] %vm77, %v83
    // Predicated region
    $region30: #{tpu_custom_call.1} parent=1 // pred_check
      _
    $region31: #{tpu_custom_call.1} parent=1 // pred_check_branch
      %86 = sbr.rel (0) target = $region33
    $region32: #{tpu_custom_call.1} parent=1 // pred_region
      _
    $region33: #{tpu_custom_call.1} parent=1 // pred_fallthru
      _
    // Predicated region
    $region34: #{tpu_custom_call.1} parent=1 // pred_check
      _
    $region35: #{tpu_custom_call.1} parent=1 // pred_check_branch
      %88 = sbr.rel (0) target = $region37
    $region36: #{tpu_custom_call.1} parent=1 // pred_region
      _
    $region37: #{tpu_custom_call.1} parent=1 // pred_fallthru
      _
    // Predicated region
    $region38: #{tpu_custom_call.1} parent=1 // pred_check
      _
    $region39: #{tpu_custom_call.1} parent=1 // pred_check_branch
      %90 = sbr.rel (0) target = $region41
    $region40: #{tpu_custom_call.1} parent=1 // pred_region
      _
    $region41: #{tpu_custom_call.1} parent=1 // pred_fallthru
      _
    // Predicated region
    $region42: #{tpu_custom_call.1} parent=1 // pred_check
      _
    $region43: #{tpu_custom_call.1} parent=1 // pred_check_branch
      %92 = sbr.rel (0) target = $region45
    $region44: #{tpu_custom_call.1} parent=1 // pred_region
      _
    $region45: #{tpu_custom_call.1} parent=1 // pred_fallthru
      _
    %93 = vsyncpa [#allocation3], 1
    %94 = vsyncpa [#allocation5], 1

</llo_original>
